<compile_context>
chip_gen: v7x
topology: tpu7x:2x2x1
jax: 0.10.0
libtpu: 0.0.40
codegen_flags: <defaults>
</compile_context>

<pallas_src>
import functools
import re
from typing import NamedTuple

import jax
import jax.numpy as jnp
from jax.experimental import pallas as pl
from jax.experimental.pallas import tpu as pltpu

_SUBLANE = 8        # f32 sublane granularity
_NEG_BIG = -1e30    # fills padded logit columns; exp(_NEG_BIG - m) underflows to exactly 0 in f32


def _round_up(x, m):
    return pl.cdiv(x, m) * m


class _TpuConfig(NamedTuple):
    generation: int
    num_tensorcores: int
    vmem_limit_bytes: int
    vmem_budget_bytes: int


@functools.lru_cache(maxsize=None)
def _tpu_config() -> _TpuConfig:
    """One-time (outside the hot path) probe of the attached TPU generation / VMEM."""
    generation = 6
    try:
        kind = jax.devices()[0].device_kind.lower()
        m = re.search(r"(\d+)", kind)
        if m:
            generation = int(m.group(1))
    except Exception:
        pass
    num_tensorcores = 2 if generation >= 7 else 1
    if generation >= 7:          # v7x: 64 MiB physical VMEM per TC
        vmem_limit, vmem_budget = 48 * 2**20, 32 * 2**20
    else:                        # v5e / v6e: 128 MiB physical VMEM
        vmem_limit, vmem_budget = 64 * 2**20, 48 * 2**20
    try:
        physical = int(pltpu.get_tpu_info().vmem_capacity_bytes)
        vmem_limit = min(vmem_limit, (physical * 3) // 4)
        vmem_budget = min(vmem_budget, (vmem_limit * 3) // 4)
    except Exception:
        pass
    return _TpuConfig(generation, num_tensorcores, vmem_limit, vmem_budget)


# --------------------------------------------------------------------------------------------
# Kernel
# --------------------------------------------------------------------------------------------
def attention_net_kernel(x_ref, w1_ref, b1_ref, w2_ref, b2_ref, o_ref):
    # x_ref:  (tile_b, D_pad) in the MXU compute dtype
    # w1_ref: (D_pad, H_pad), b1_ref: (1, H_pad)  [bias is f32]
    # w2_ref: (H_pad, D_pad), b2_ref: (1, D_pad)  [padded cols of b2 hold _NEG_BIG]
    # o_ref:  (tile_b, D_pad)
    h = jnp.dot(x_ref[...], w1_ref[...], preferred_element_type=jnp.float32) + b1_ref[...]
    h = jnp.maximum(h, 0.0)                      # ReLU; dropout is identity at inference

    logits = (
        jnp.dot(h.astype(w2_ref.dtype), w2_ref[...], preferred_element_type=jnp.float32)
        + b2_ref[...]
    )

    # softmax over the feature axis (== PyTorch dim=1 for (B, input_dim) inputs).
    # Padded columns carry a -1e30 bias -> exp underflows to 0 -> they never perturb max/sum.
    m = jnp.max(logits, axis=-1, keepdims=True)
    e = jnp.exp(logits - m)
    o_ref[...] = (e / jnp.sum(e, axis=-1, keepdims=True)).astype(o_ref.dtype)


# --------------------------------------------------------------------------------------------
# Wrapper helpers
# --------------------------------------------------------------------------------------------
def _pad_2d(a, rows, cols, dtype, *, fill=0.0):
    """Pad `a` to (rows, cols) in `dtype`; returned as-is (no copy) when already conforming."""
    a = jnp.asarray(a)
    r, c = a.shape
    if (r, c) == (rows, cols) and a.dtype == jnp.dtype(dtype):
        return a
    base = jnp.full((rows, cols), fill, dtype) if fill != 0.0 else jnp.zeros((rows, cols), dtype)
    return base.at[:r, :c].set(a.astype(dtype))


def prepare_attention_net_params(w1, b1, w2, b2, *, compute_dtype=jnp.bfloat16, lane=None):
    """Pad weights/biases ONCE (model init) to a lane-dense layout.

    Weights are stored transposed relative to PyTorch: (in, out) instead of (out, in).
    compute_dtype is the MXU dtype for x/W1/W2; biases stay f32 (accumulation/softmax are f32).
    """
    w1 = jnp.asarray(w1)
    w2 = jnp.asarray(w2)
    in_dim, hid_dim = w1.shape
    assert w2.shape == (hid_dim, in_dim)

    cfg = _tpu_config()
    if lane is None:
        # v6e/v7x MXUs are 2x256x256 -> 256-wide panels when the pad fraction is small.
        lane = 256 if (cfg.generation >= 6 and min(in_dim, hid_dim) >= 512) else 128
    d_pad = _round_up(in_dim, lane)
    h_pad = _round_up(hid_dim, lane)
    mm_dtype = jnp.dtype(compute_dtype)

    b1 = jnp.reshape(jnp.asarray(b1), (1, hid_dim))
    b2 = jnp.reshape(jnp.asarray(b2), (1, in_dim))

    return dict(
        w1=_pad_2d(w1, d_pad, h_pad, mm_dtype),
        b1=_pad_2d(b1, 1, h_pad, jnp.float32),
        w2=_pad_2d(w2, h_pad, d_pad, mm_dtype),
        # Padded logit columns get a huge negative bias so softmax ignores them exactly.
        b2=_pad_2d(b2, 1, d_pad, jnp.float32, fill=_NEG_BIG),
        in_dim=in_dim, hid_dim=hid_dim, d_pad=d_pad, h_pad=h_pad, mm_dtype=mm_dtype,
    )


def _choose_tile_b(batch, d_pad, h_pad, itemsize, cfg):
    """Chip- and dtype-aware batch-row tile sized against the VMEM budget."""
    row_mult = max(_SUBLANE, 32 // itemsize)     # 8 (f32), 16 (bf16), 32 (int8/fp8) sublane packing
    b_pad = _round_up(batch, row_mult)

    # Pipeline footprint: weight/bias blocks (worst case double-buffered), double-buffered
    # x/out tiles, plus f32 intermediates (h, logits, exp).
    fixed = 2 * (d_pad * h_pad + h_pad * d_pad) * itemsize + 2 * (h_pad + d_pad) * 4 * _SUBLANE
    per_row = 2 * d_pad * itemsize + 2 * d_pad * 4 + (h_pad + 2 * d_pad) * 4
    avail = max(cfg.vmem_budget_bytes - fixed, row_mult * per_row)
    tile = int((avail // per_row) // row_mult * row_mult)
    tile = max(row_mult, min(tile, int(b_pad)))

    if cfg.num_tensorcores > 1:
        # v7x: keep ~4 grid steps per TensorCore (DMA/compute overlap + both cores fed),
        # but never shrink below ~256 rows when the batch allows.
        floor = min(int(b_pad), _round_up(256, row_mult))
        per_step = _round_up(pl.cdiv(int(b_pad), 4 * cfg.num_tensorcores), row_mult)
        tile = min(tile, max(per_step, floor))
    # Single-TC chips (v5e/v6e): the grid is a sequential loop, so one large VMEM-budgeted
    # tile is best -- no forced splitting.
    return tile


def attention_net_apply(params, x, *, tile_b=None, out_dtype=None):
    """Fused proj1 -> ReLU -> proj2 -> softmax(dim=1) for a 2-D input (B, input_dim)."""
    assert x.ndim == 2 and x.shape[1] == params["in_dim"]
    cfg = _tpu_config()

    orig_b = x.shape[0]
    in_dim, d_pad, h_pad = params["in_dim"], params["d_pad"], params["h_pad"]
    mm_dtype = params["mm_dtype"]
    itemsize = jnp.dtype(mm_dtype).itemsize
    out_dtype = x.dtype if out_dtype is None else out_dtype

    if tile_b is None:
        tile_b = _choose_tile_b(orig_b, d_pad, h_pad, itemsize, cfg)
    b_pad = _round_up(orig_b, tile_b)

    # Pad/cast x only when needed (no-op passthrough when already lane-dense & right dtype).
    xp = _pad_2d(x, b_pad, d_pad, mm_dtype)

    grid = (b_pad // tile_b,)

    cost = pl.CostEstimate(
        flops=2 * b_pad * (d_pad * h_pad + h_pad * d_pad),
        transcendentals=b_pad * d_pad,  # exp in the softmax
        bytes_accessed=(xp.size + params["w1"].size + params["w2"].size) * itemsize
        + (params["b1"].size + params["b2"].size) * 4
        + b_pad * d_pad * jnp.dtype(out_dtype).itemsize,
    )

    out = pl.pallas_call(
        attention_net_kernel,
        out_shape=jax.ShapeDtypeStruct((b_pad, d_pad), out_dtype),
        grid_spec=pltpu.PrefetchScalarGridSpec(
            num_scalar_prefetch=0,
            grid=grid,
            in_specs=[
                pl.BlockSpec((tile_b, d_pad), lambda i: (i, 0)),   # x tile (pipelined over batch)
                pl.BlockSpec((d_pad, h_pad), lambda i: (0, 0)),    # W1 (constant block)
                pl.BlockSpec((1, h_pad), lambda i: (0, 0)),        # b1
                pl.BlockSpec((h_pad, d_pad), lambda i: (0, 0)),    # W2 (constant block)
                pl.BlockSpec((1, d_pad), lambda i: (0, 0)),        # b2
            ],
            out_specs=pl.BlockSpec((tile_b, d_pad), lambda i: (i, 0)),
        ),
        compiler_params=pltpu.CompilerParams(
            dimension_semantics=("parallel",),
            vmem_limit_bytes=cfg.vmem_limit_bytes,
        ),
        cost_estimate=cost,
    )(xp, params["w1"], params["b1"], params["w2"], params["b2"])

    if (b_pad, d_pad) != (orig_b, in_dim):
        out = out[:orig_b, :in_dim]
    return out


def attention_net_forward(x, w1, b1, w2, b2, *, compute_dtype=None, tile_b=None):
    """Convenience wrapper. Prefer prepare_attention_net_params() once + attention_net_apply()."""
    if compute_dtype is None:
        compute_dtype = jnp.bfloat16 if x.dtype == jnp.float32 else x.dtype
    params = prepare_attention_net_params(w1, b1, w2, b2, compute_dtype=compute_dtype)
    return attention_net_apply(params, x, tile_b=tile_b)


def reference_forward(x, w1, b1, w2, b2):
    h = jnp.maximum(x @ w1 + b1, 0.0)
    return jax.nn.softmax(h @ w2 + b2, axis=1)


if __name__ == "__main__":
    # Small shapes implied by the module: (B, input_dim) input, hidden_dim projection.
    B, input_dim, hidden_dim = 8, 16, 32

    key = jax.random.PRNGKey(0)
    kx, k1, k2, k3, k4 = jax.random.split(key, 5)

    x = jax.random.normal(kx, (B, input_dim), dtype=jnp.float32)
    # Linear weights stored as (in, out), i.e. transposed relative to PyTorch's (out, in).
    w1 = jax.random.normal(k1, (input_dim, hidden_dim), dtype=jnp.float32) * 0.1
    b1 = jax.random.normal(k2, (1, hidden_dim), dtype=jnp.float32) * 0.1
    w2 = jax.random.normal(k3, (hidden_dim, input_dim), dtype=jnp.float32) * 0.1
    b2 = jax.random.normal(k4, (1, input_dim), dtype=jnp.float32) * 0.1

    ref = reference_forward(x, w1, b1, w2, b2)

    # f32 MXU path: tight match against the pure-JAX reference.
    params_f32 = prepare_attention_net_params(w1, b1, w2, b2, compute_dtype=jnp.float32)
    out_f32 = jax.block_until_ready(attention_net_apply(params_f32, x))
    assert out_f32.shape == (B, input_dim)
    assert jnp.allclose(out_f32, ref, atol=1e-5, rtol=1e-5), "f32 path mismatch vs reference"
    assert jnp.allclose(jnp.sum(out_f32, axis=1), jnp.ones((B,)), atol=1e-5)

    # Default bf16 MXU path (f32 bias / accumulation / softmax): relaxed tolerance.
    params_bf16 = prepare_attention_net_params(w1, b1, w2, b2)   # compute_dtype defaults to bf16
    out_bf16 = jax.block_until_ready(attention_net_apply(params_bf16, x))
    assert out_bf16.shape == (B, input_dim)
    assert jnp.allclose(out_bf16, ref, atol=2e-2, rtol=2e-2), "bf16 path mismatch vs reference"
    assert jnp.allclose(jnp.sum(out_bf16, axis=1), jnp.ones((B,)), atol=1e-3)

    print("KERNEL_OK")
</pallas_src>

<mosaic_0001>
module attributes {stable_mosaic.version = 11 : i64} {
  func.func @attention_net_kernel(%arg0: i32, %arg1: memref<8x128xf32, #tpu.memory_space<vmem>>, %arg2: memref<128x128xf32, #tpu.memory_space<vmem>>, %arg3: memref<1x128xf32, #tpu.memory_space<vmem>>, %arg4: memref<128x128xf32, #tpu.memory_space<vmem>>, %arg5: memref<1x128xf32, #tpu.memory_space<vmem>>, %arg6: memref<8x128xf32, #tpu.memory_space<vmem>>) attributes {dimension_semantics = [#tpu.dimension_semantics<parallel>], iteration_bounds = array<i64: 1>, scalar_prefetch = 0 : i64, scratch_operands = 0 : i64, tpu.core_type = #tpu.core_type<tc>, window_params = [{transform_indices = @transform_0, window_bounds = array<i64: 8, 128>}, {pipeline_mode = #tpu.pipeline_mode<synchronous>, transform_indices = @transform_1, window_bounds = array<i64: 128, 128>}, {pipeline_mode = #tpu.pipeline_mode<synchronous>, transform_indices = @transform_2, window_bounds = array<i64: 1, 128>}, {pipeline_mode = #tpu.pipeline_mode<synchronous>, transform_indices = @transform_3, window_bounds = array<i64: 128, 128>}, {pipeline_mode = #tpu.pipeline_mode<synchronous>, transform_indices = @transform_4, window_bounds = array<i64: 1, 128>}, {transform_indices = @transform_5, window_bounds = array<i64: 8, 128>}]} {
    %c0 = arith.constant 0 : index
    %c0_0 = arith.constant 0 : index
    %0 = vector.load %arg1[%c0, %c0_0] : memref<8x128xf32, #tpu.memory_space<vmem>>, vector<8x128xf32>
    %c0_1 = arith.constant 0 : index
    %c0_2 = arith.constant 0 : index
    %1 = vector.load %arg2[%c0_1, %c0_2] : memref<128x128xf32, #tpu.memory_space<vmem>>, vector<128x128xf32>
    %cst = arith.constant dense<0.000000e+00> : vector<8x128xf32>
    %2 = tpu.matmul %0, %1, %cst {dimension_numbers = #tpu.dot_dimension_numbers<[1], [0], [0], [1], [0, 0, 1, 1], [], []>} : vector<8x128xf32>, vector<128x128xf32>, vector<8x128xf32> -> vector<8x128xf32>
    %c0_3 = arith.constant 0 : index
    %c0_4 = arith.constant 0 : index
    %3 = vector.load %arg3[%c0_3, %c0_4] : memref<1x128xf32, #tpu.memory_space<vmem>>, vector<1x128xf32>
    %4 = vector.broadcast %3 : vector<1x128xf32> to vector<8x128xf32>
    %5 = arith.addf %2, %4 : vector<8x128xf32>
    %cst_5 = arith.constant 0.000000e+00 : f32
    %6 = vector.broadcast %cst_5 : f32 to vector<8x128xf32>
    %7 = arith.maximumf %5, %6 : vector<8x128xf32>
    %c0_6 = arith.constant 0 : index
    %c0_7 = arith.constant 0 : index
    %8 = vector.load %arg4[%c0_6, %c0_7] : memref<128x128xf32, #tpu.memory_space<vmem>>, vector<128x128xf32>
    %cst_8 = arith.constant dense<0.000000e+00> : vector<8x128xf32>
    %9 = tpu.matmul %7, %8, %cst_8 {dimension_numbers = #tpu.dot_dimension_numbers<[1], [0], [0], [1], [0, 0, 1, 1], [], []>} : vector<8x128xf32>, vector<128x128xf32>, vector<8x128xf32> -> vector<8x128xf32>
    %c0_9 = arith.constant 0 : index
    %c0_10 = arith.constant 0 : index
    %10 = vector.load %arg5[%c0_9, %c0_10] : memref<1x128xf32, #tpu.memory_space<vmem>>, vector<1x128xf32>
    %11 = vector.broadcast %10 : vector<1x128xf32> to vector<8x128xf32>
    %12 = arith.addf %9, %11 : vector<8x128xf32>
    %cst_11 = arith.constant dense<0xFF800000> : vector<8xf32>
    %13 = vector.multi_reduction <maximumf>, %12, %cst_11 [1] : vector<8x128xf32> to vector<8xf32>
    %14 = vector.shape_cast %13 : vector<8xf32> to vector<8x1xf32>
    %15 = vector.broadcast %14 : vector<8x1xf32> to vector<8x128xf32>
    %16 = arith.subf %12, %15 : vector<8x128xf32>
    %17 = math.exp %16 : vector<8x128xf32>
    %cst_12 = arith.constant dense<0.000000e+00> : vector<8xf32>
    %18 = vector.multi_reduction <add>, %17, %cst_12 [1] : vector<8x128xf32> to vector<8xf32>
    %19 = vector.shape_cast %18 : vector<8xf32> to vector<8x1xf32>
    %20 = vector.broadcast %19 : vector<8x1xf32> to vector<8x128xf32>
    %21 = arith.divf %17, %20 : vector<8x128xf32>
    %c0_13 = arith.constant 0 : index
    %c0_14 = arith.constant 0 : index
    %22 = vector.load %arg6[%c0_13, %c0_14] : memref<8x128xf32, #tpu.memory_space<vmem>>, vector<8x128xf32>
    tpu.vector_store %arg6[%c0_13, %c0_14], %21 {strides = array<i32>} : memref<8x128xf32, #tpu.memory_space<vmem>>, vector<8x128xf32>,
    return
  }
  func.func @transform_0(%arg0: i32) -> (i32, i32) {
    %c0_i32 = arith.constant 0 : i32
    %c0_i32_0 = arith.constant 0 : i32
    return %arg0, %c0_i32 : i32, i32
  }
  func.func @transform_1(%arg0: i32) -> (i32, i32) {
    %c0_i32 = arith.constant 0 : i32
    %c0_i32_0 = arith.constant 0 : i32
    %c0_i32_1 = arith.constant 0 : i32
    return %c0_i32, %c0_i32_0 : i32, i32
  }
  func.func @transform_2(%arg0: i32) -> (i32, i32) {
    %c0_i32 = arith.constant 0 : i32
    %c0_i32_0 = arith.constant 0 : i32
    %c0_i32_1 = arith.constant 0 : i32
    return %c0_i32, %c0_i32_0 : i32, i32
  }
  func.func @transform_3(%arg0: i32) -> (i32, i32) {
    %c0_i32 = arith.constant 0 : i32
    %c0_i32_0 = arith.constant 0 : i32
    %c0_i32_1 = arith.constant 0 : i32
    return %c0_i32, %c0_i32_0 : i32, i32
  }
  func.func @transform_4(%arg0: i32) -> (i32, i32) {
    %c0_i32 = arith.constant 0 : i32
    %c0_i32_0 = arith.constant 0 : i32
    %c0_i32_1 = arith.constant 0 : i32
    return %c0_i32, %c0_i32_0 : i32, i32
  }
  func.func @transform_5(%arg0: i32) -> (i32, i32) {
    %c0_i32 = arith.constant 0 : i32
    %c0_i32_0 = arith.constant 0 : i32
    return %arg0, %c0_i32 : i32, i32
  }
}

</mosaic_0001>

<llo_original>
// kernel: tpu_custom_call.1
$region0: #{tpu_custom_call.1}
  #allocation0 [shape = 'u32[]', space=smem, size = 0x4, offset = 0x4, fixed_abs, tag = 'smem constant byte address 0x4 - core index']
  #allocation1 [shape = 'u32[144,128]{1,0:T(1,128)}', space=vmem, size = 0x12000, scoped, tag = 'internal scratch']
  %s0 = inlined_call_operand.hbm [shape: f32[8,128], index: 0, kind: input, shape index: {}]
  %s1 = inlined_call_operand.hbm [shape: f32[128,128], index: 1, kind: input, shape index: {}]
  %s2 = inlined_call_operand.hbm [shape: f32[1,128], index: 2, kind: input, shape index: {}]
  %s3 = inlined_call_operand.hbm [shape: f32[128,128], index: 3, kind: input, shape index: {}]
  %s4 = inlined_call_operand.hbm [shape: f32[1,128], index: 4, kind: input, shape index: {}]
  %s5 = inlined_call_operand.hbm [shape: f32[8,128], index: 5, kind: output, shape index: {}]
  %s6 = sld [smem:[#allocation0]]
  $region50: #{tpu_custom_call.1} parent=0
    _
  %s8 = ssub.s32 1, %s6
  %s9 = scalar_select 0, %s8, %s6
  $region1: #{tpu_custom_call.1} parent=0
    #allocation2 [shape = 'u8[4096]{0}', space=vmem, size = 0x1000, scoped, tag = 'input window, operand 0, single buffered']
    #allocation3 [shape = 's32[1]{0}', space=sflag, size = 0x4, scoped, tag = 'scoped memory for tpu_custom_call.1']
    #allocation4 [shape = 's32[1]{0}', space=sflag, size = 0x4, scoped, tag = 'scoped memory for tpu_custom_call.1']
    #allocation5 [shape = 'u8[65536]{0}', space=vmem, size = 0x10000, scoped, tag = 'input window, operand 1, single buffered']
    #allocation6 [shape = 's32[1]{0}', space=sflag, size = 0x4, scoped, tag = 'scoped memory for tpu_custom_call.1']
    #allocation7 [shape = 'u8[512]{0}', space=vmem, size = 0x400, scoped, tag = 'input window, operand 2, single buffered']
    #allocation8 [shape = 'u8[65536]{0}', space=vmem, size = 0x10000, scoped, tag = 'input window, operand 3, single buffered']
    #allocation9 [shape = 's32[1]{0}', space=sflag, size = 0x4, scoped, tag = 'scoped memory for tpu_custom_call.1']
    #allocation10 [shape = 'u8[512]{0}', space=vmem, size = 0x400, scoped, tag = 'input window, operand 4, single buffered']
    #allocation11 [shape = 'u8[4096]{0}', space=vmem, size = 0x1000, scoped, tag = 'output window, operand 0, single buffered']
    %10 = vsyncpa [#allocation3], 0
    %11 = vsyncpa [#allocation6], 0
    %12 = vsyncpa [#allocation9], 0
    %13 = vsyncpa [#allocation4], 0
    // Predicated region
    $region2: #{tpu_custom_call.1} parent=1 // pred_check
      _
    $region3: #{tpu_custom_call.1} parent=1 // pred_check_branch
      %15 = sbr.rel (0) target = $region5
    $region4: #{tpu_custom_call.1} parent=1 // pred_region
      %s17 = ssub.s32 128, 128
      %18 = vsyncadd [#allocation3], %s17
      %s20 = sshll.u32 [#allocation2], 4
      %s21 = int_to_ptr.vmem [resolvable:$true] %s20
      %23 = dma.hbm_to_vmem [thread:$0]  %s0, 128, %s21, [#allocation3]
    $region5: #{tpu_custom_call.1} parent=1 // pred_fallthru
      _
    // Predicated region
    $region6: #{tpu_custom_call.1} parent=1 // pred_check
      _
    $region7: #{tpu_custom_call.1} parent=1 // pred_check_branch
      %25 = sbr.rel (0) target = $region9
    $region8: #{tpu_custom_call.1} parent=1 // pred_region
      %s27 = ssub.s32 2048, 2048
      %28 = vsyncadd [#allocation6], %s27
      %s29 = sshll.u32 [#allocation5], 4
      %s30 = int_to_ptr.vmem [resolvable:$true] %s29
      %35 = dma.hbm_to_vmem [thread:$0]  %s1, 2048, %s30, [#allocation6], 128, 128, 8
    $region9: #{tpu_custom_call.1} parent=1 // pred_fallthru
      _
    // Predicated region
    $region10: #{tpu_custom_call.1} parent=1 // pred_check
      _
    $region11: #{tpu_custom_call.1} parent=1 // pred_check_branch
      %37 = sbr.rel (0) target = $region13
    $region12: #{tpu_custom_call.1} parent=1 // pred_region
      %s39 = ssub.s32 16, 16
      %40 = vsyncadd [#allocation6], %s39
      %s42 = sshll.u32 [#allocation7], 4
      %s43 = int_to_ptr.vmem [resolvable:$true] %s42
      %45 = dma.hbm_to_vmem [thread:$0]  %s2, 16, %s43, [#allocation6]
    $region13: #{tpu_custom_call.1} parent=1 // pred_fallthru
      _
    // Predicated region
    $region14: #{tpu_custom_call.1} parent=1 // pred_check
      _
    $region15: #{tpu_custom_call.1} parent=1 // pred_check_branch
      %47 = sbr.rel (0) target = $region17
    $region16: #{tpu_custom_call.1} parent=1 // pred_region
      %s49 = ssub.s32 2048, 2048
      %50 = vsyncadd [#allocation9], %s49
      %s51 = sshll.u32 [#allocation8], 4
      %s52 = int_to_ptr.vmem [resolvable:$true] %s51
      %57 = dma.hbm_to_vmem [thread:$0]  %s3, 2048, %s52, [#allocation9], 128, 128, 8
    $region17: #{tpu_custom_call.1} parent=1 // pred_fallthru
      _
    // Predicated region
    $region18: #{tpu_custom_call.1} parent=1 // pred_check
      _
    $region19: #{tpu_custom_call.1} parent=1 // pred_check_branch
      %59 = sbr.rel (0) target = $region21
    $region20: #{tpu_custom_call.1} parent=1 // pred_region
      %s61 = ssub.s32 16, 16
      %62 = vsyncadd [#allocation9], %s61
      %s64 = sshll.u32 [#allocation10], 4
      %s65 = int_to_ptr.vmem [resolvable:$true] %s64
      %67 = dma.hbm_to_vmem [thread:$0]  %s4, 16, %s65, [#allocation9]
    $region21: #{tpu_custom_call.1} parent=1 // pred_fallthru
      _
    // Predicated region
    $region22: #{tpu_custom_call.1} parent=1 // pred_check
      _
    $region23: #{tpu_custom_call.1} parent=1 // pred_check_branch
      %69 = sbr.rel (0) target = $region25
    $region24: #{tpu_custom_call.1} parent=1 // pred_region
      %70 = dma.done [#allocation3], 128
    $region25: #{tpu_custom_call.1} parent=1 // pred_fallthru
      _
    // Predicated region
    $region26: #{tpu_custom_call.1} parent=1 // pred_check
      _
    $region27: #{tpu_custom_call.1} parent=1 // pred_check_branch
      %72 = sbr.rel (0) target = $region29
    $region28: #{tpu_custom_call.1} parent=1 // pred_region
      %73 = dma.done [#allocation6], 2048
    $region29: #{tpu_custom_call.1} parent=1 // pred_fallthru
      _
    // Predicated region
    $region30: #{tpu_custom_call.1} parent=1 // pred_check
      _
    $region31: #{tpu_custom_call.1} parent=1 // pred_check_branch
      %75 = sbr.rel (0) target = $region33
    $region32: #{tpu_custom_call.1} parent=1 // pred_region
      %76 = dma.done [#allocation6], 16
    $region33: #{tpu_custom_call.1} parent=1 // pred_fallthru
      _
    // Predicated region
    $region34: #{tpu_custom_call.1} parent=1 // pred_check
      _
    $region35: #{tpu_custom_call.1} parent=1 // pred_check_branch
      %78 = sbr.rel (0) target = $region37
    $region36: #{tpu_custom_call.1} parent=1 // pred_region
      %79 = dma.done [#allocation9], 2048
    $region37: #{tpu_custom_call.1} parent=1 // pred_fallthru
      _
    // Predicated region
    $region38: #{tpu_custom_call.1} parent=1 // pred_check
      _
    $region39: #{tpu_custom_call.1} parent=1 // pred_check_branch
      %81 = sbr.rel (0) target = $region41
    $region40: #{tpu_custom_call.1} parent=1 // pred_region
      %82 = dma.done [#allocation9], 16
    $region41: #{tpu_custom_call.1} parent=1 // pred_fallthru
      _
    %v83 = vld [vmem:[#allocation2] sm:$0xff]
    %v84 = vld [vmem:[#allocation5] sm:$0xff]
    %v85 = vld [vmem:[#allocation5 + $0x8] sm:$0xff]
    %v86 = vld [vmem:[#allocation5 + $0x10] sm:$0xff]
    %v87 = vld [vmem:[#allocation5 + $0x18] sm:$0xff]
    %v88 = vld [vmem:[#allocation5 + $0x20] sm:$0xff]
    %v89 = vld [vmem:[#allocation5 + $0x28] sm:$0xff]
    %v90 = vld [vmem:[#allocation5 + $0x30] sm:$0xff]
    %v91 = vld [vmem:[#allocation5 + $0x38] sm:$0xff]
    %v92 = vld [vmem:[#allocation5 + $0x40] sm:$0xff]
    %v93 = vld [vmem:[#allocation5 + $0x48] sm:$0xff]
    %v94 = vld [vmem:[#allocation5 + $0x50] sm:$0xff]
    %v95 = vld [vmem:[#allocation5 + $0x58] sm:$0xff]
    %v96 = vld [vmem:[#allocation5 + $0x60] sm:$0xff]
    %v97 = vld [vmem:[#allocation5 + $0x68] sm:$0xff]
    %v98 = vld [vmem:[#allocation5 + $0x70] sm:$0xff]
    %v99 = vld [vmem:[#allocation5 + $0x78] sm:$0xff]
    %v100 = vld [vmem:[#allocation7] sm:$0x1]
    %v102 = vlaneseq
    %v103 = vshrl.u32 %v102, 7
    %v104 = vsub.s32 0, %v103
    %v105 = vrot.slane %v100, %v104
    %107 = vmatprep.subr.mxu0 0.0
    %108 = vmatpush1.msra.mxu0 %v84
    %109 = vmatprep.subr.mxu0 0.0
    %110 = vmatpush1.msra.mxu0 %v85
    %111 = vmatprep.subr.mxu0 0.0
    %112 = vmatpush1.msra.mxu0 %v86
    %113 = vmatprep.subr.mxu0 0.0
    %114 = vmatpush1.msra.mxu0 %v87
    %115 = vmatprep.subr.mxu0 0.0
    %116 = vmatpush1.msra.mxu0 %v88
    %117 = vmatprep.subr.mxu0 0.0
    %118 = vmatpush1.msra.mxu0 %v89
    %119 = vmatprep.subr.mxu0 0.0
    %120 = vmatpush1.msra.mxu0 %v90
    %121 = vmatprep.subr.mxu0 0.0
    %122 = vmatpush1.msra.mxu0 %v91
    %123 = vmatprep.subr.mxu0 0.0
    %124 = vmatpush1.msra.mxu0 %v92
    %125 = vmatprep.subr.mxu0 0.0
    %126 = vmatpush1.msra.mxu0 %v93
    %127 = vmatprep.subr.mxu0 0.0
    %128 = vmatpush1.msra.mxu0 %v94
    %129 = vmatprep.subr.mxu0 0.0
    %130 = vmatpush1.msra.mxu0 %v95
    %131 = vmatprep.subr.mxu0 0.0
    %132 = vmatpush1.msra.mxu0 %v96
    %133 = vmatprep.subr.mxu0 0.0
    %134 = vmatpush1.msra.mxu0 %v97
    %135 = vmatprep.subr.mxu0 0.0
    %136 = vmatpush1.msra.mxu0 %v98
    %137 = vmatprep.subr.mxu0 0.0
    %138 = vmatpush1.msra.mxu0 %v99
    %139 = vmatprep.subr.mxu0 0.0
    %140 = vmatpush1.msra.mxu0 0.0
    %141 = vmatprep.subr.mxu0 0.0
    %142 = vmatpush1.msra.mxu0 0.0
    %143 = vmatprep.subr.mxu0 0.0
    %144 = vmatpush1.msra.mxu0 0.0
    %145 = vmatprep.subr.mxu0 0.0
    %146 = vmatpush1.msra.mxu0 0.0
    %147 = vmatprep.subr.mxu0 0.0
    %148 = vmatpush1.msra.mxu0 0.0
    %149 = vmatprep.subr.mxu0 0.0
    %150 = vmatpush1.msra.mxu0 0.0
    %151 = vmatprep.subr.mxu0 0.0
    %152 = vmatpush1.msra.mxu0 0.0
    %153 = vmatprep.subr.mxu0 0.0
    %154 = vmatpush1.msra.mxu0 0.0
    %155 = vmatprep.subr.mxu0 0.0
    %156 = vmatpush1.msra.mxu0 0.0
    %157 = vmatprep.subr.mxu0 0.0
    %158 = vmatpush1.msra.mxu0 0.0
    %159 = vmatprep.subr.mxu0 0.0
    %160 = vmatpush1.msra.mxu0 0.0
    %161 = vmatprep.subr.mxu0 0.0
    %162 = vmatpush1.msra.mxu0 0.0
    %163 = vmatprep.subr.mxu0 0.0
    %164 = vmatpush1.msra.mxu0 0.0
    %165 = vmatprep.subr.mxu0 0.0
    %166 = vmatpush1.msra.mxu0 0.0
    %167 = vmatprep.subr.mxu0 0.0
    %168 = vmatpush1.msra.mxu0 0.0
    %169 = vmatprep.subr.mxu0 0.0
    %170 = vmatpush1.msra.mxu0 0.0
    %171 = vmatprep.mubr.f32.mxu0 0.0
    %172 = vmatmul.mubr.f32.gmra.mrb[0].mxu0 %v83
    %v173 = vpop.f32.mrb[0].mxu0
    %v174 = vadd.f32 %v105, %v173
    %v175 = vpop.f32.mrb[0].mxu0
    %176 = vdwg.mxu0
    %v177 = vmax.f32 %v174, 0.0
    %v178 = vld [vmem:[#allocation8] sm:$0xff]
    %v179 = vld [vmem:[#allocation8 + $0x8] sm:$0xff]
    %v180 = vld [vmem:[#allocation8 + $0x10] sm:$0xff]
    %v181 = vld [vmem:[#allocation8 + $0x18] sm:$0xff]
    %v182 = vld [vmem:[#allocation8 + $0x20] sm:$0xff]
    %v183 = vld [vmem:[#allocation8 + $0x28] sm:$0xff]
    %v184 = vld [vmem:[#allocation8 + $0x30] sm:$0xff]
    %v185 = vld [vmem:[#allocation8 + $0x38] sm:$0xff]
    %v186 = vld [vmem:[#allocation8 + $0x40] sm:$0xff]
    %v187 = vld [vmem:[#allocation8 + $0x48] sm:$0xff]
    %v188 = vld [vmem:[#allocation8 + $0x50] sm:$0xff]
    %v189 = vld [vmem:[#allocation8 + $0x58] sm:$0xff]
    %v190 = vld [vmem:[#allocation8 + $0x60] sm:$0xff]
    %v191 = vld [vmem:[#allocation8 + $0x68] sm:$0xff]
    %v192 = vld [vmem:[#allocation8 + $0x70] sm:$0xff]
    %v193 = vld [vmem:[#allocation8 + $0x78] sm:$0xff]
    %v194 = vld [vmem:[#allocation10] sm:$0x1]
    %v196 = vlaneseq
    %v197 = vshrl.u32 %v196, 7
    %v198 = vsub.s32 0, %v197
    %v199 = vrot.slane %v194, %v198
    %201 = vmatprep.subr.mxu0 0.0
    %202 = vmatpush1.msra.mxu0 %v178
    %203 = vmatprep.subr.mxu0 0.0
    %204 = vmatpush1.msra.mxu0 %v179
    %205 = vmatprep.subr.mxu0 0.0
    %206 = vmatpush1.msra.mxu0 %v180
    %207 = vmatprep.subr.mxu0 0.0
    %208 = vmatpush1.msra.mxu0 %v181
    %209 = vmatprep.subr.mxu0 0.0
    %210 = vmatpush1.msra.mxu0 %v182
    %211 = vmatprep.subr.mxu0 0.0
    %212 = vmatpush1.msra.mxu0 %v183
    %213 = vmatprep.subr.mxu0 0.0
    %214 = vmatpush1.msra.mxu0 %v184
    %215 = vmatprep.subr.mxu0 0.0
    %216 = vmatpush1.msra.mxu0 %v185
    %217 = vmatprep.subr.mxu0 0.0
    %218 = vmatpush1.msra.mxu0 %v186
    %219 = vmatprep.subr.mxu0 0.0
    %220 = vmatpush1.msra.mxu0 %v187
    %221 = vmatprep.subr.mxu0 0.0
    %222 = vmatpush1.msra.mxu0 %v188
    %223 = vmatprep.subr.mxu0 0.0
    %224 = vmatpush1.msra.mxu0 %v189
    %225 = vmatprep.subr.mxu0 0.0
    %226 = vmatpush1.msra.mxu0 %v190
    %227 = vmatprep.subr.mxu0 0.0
    %228 = vmatpush1.msra.mxu0 %v191
    %229 = vmatprep.subr.mxu0 0.0
    %230 = vmatpush1.msra.mxu0 %v192
    %231 = vmatprep.subr.mxu0 0.0
    %232 = vmatpush1.msra.mxu0 %v193
    %233 = vmatprep.subr.mxu0 0.0
    %234 = vmatpush1.msra.mxu0 0.0
    %235 = vmatprep.subr.mxu0 0.0
    %236 = vmatpush1.msra.mxu0 0.0
    %237 = vmatprep.subr.mxu0 0.0
    %238 = vmatpush1.msra.mxu0 0.0
    %239 = vmatprep.subr.mxu0 0.0
    %240 = vmatpush1.msra.mxu0 0.0
    %241 = vmatprep.subr.mxu0 0.0
    %242 = vmatpush1.msra.mxu0 0.0
    %243 = vmatprep.subr.mxu0 0.0
    %244 = vmatpush1.msra.mxu0 0.0
    %245 = vmatprep.subr.mxu0 0.0
    %246 = vmatpush1.msra.mxu0 0.0
    %247 = vmatprep.subr.mxu0 0.0
    %248 = vmatpush1.msra.mxu0 0.0
    %249 = vmatprep.subr.mxu0 0.0
    %250 = vmatpush1.msra.mxu0 0.0
    %251 = vmatprep.subr.mxu0 0.0
    %252 = vmatpush1.msra.mxu0 0.0
    %253 = vmatprep.subr.mxu0 0.0
    %254 = vmatpush1.msra.mxu0 0.0
    %255 = vmatprep.subr.mxu0 0.0
    %256 = vmatpush1.msra.mxu0 0.0
    %257 = vmatprep.subr.mxu0 0.0
    %258 = vmatpush1.msra.mxu0 0.0
    %259 = vmatprep.subr.mxu0 0.0
    %260 = vmatpush1.msra.mxu0 0.0
    %261 = vmatprep.subr.mxu0 0.0
    %262 = vmatpush1.msra.mxu0 0.0
    %263 = vmatprep.subr.mxu0 0.0
    %264 = vmatpush1.msra.mxu0 0.0
    %265 = vmatprep.mubr.f32.mxu0 0.0
    %266 = vmatmul.mubr.f32.gmra.mrb[0].mxu0 %v177
    %v267 = vpop.f32.mrb[0].mxu0
    %v268 = vadd.f32 %v199, %v267
    %v269 = vpop.f32.mrb[0].mxu0
    %270 = vdwg.mxu0
    %271 = vmax.xlane.f32.xlu0 %v268
    %v272 = vpop.xlane.xlu0 %271
    %v273 = vsub.f32 %v268, %v272
    %v274 = vmul.f32 %v273, 1.442695
    %v275 = vpow.pop %v274
    %276 = vadd.xlane.f32.xlu0 %v275
    %v277 = vpop.xlane.xlu0 %276
    %v278 = vrcp.pop %v277
    %v279 = vmul.f32 %v275, %v278
    %280 = vst [vmem:[#allocation11] sm:$0xff] %v279
    // Predicated region
    $region42: #{tpu_custom_call.1} parent=1 // pred_check
      _
    $region43: #{tpu_custom_call.1} parent=1 // pred_check_branch
      %282 = sbr.rel (0) target = $region45
    $region44: #{tpu_custom_call.1} parent=1 // pred_region
      %s284 = ssub.s32 128, 128
      %285 = vsyncadd [#allocation4], %s284
      %s287 = sshll.u32 [#allocation11], 4
      %s288 = int_to_ptr.vmem [resolvable:$true] %s287
      %290 = dma.vmem_to_hbm [thread:$0]  %s288, 128, %s5, [#allocation4]
    $region45: #{tpu_custom_call.1} parent=1 // pred_fallthru
      _
    // Predicated region
    $region46: #{tpu_custom_call.1} parent=1 // pred_check
      _
    $region47: #{tpu_custom_call.1} parent=1 // pred_check_branch
      %292 = sbr.rel (0) target = $region49
    $region48: #{tpu_custom_call.1} parent=1 // pred_region
      %293 = dma.done [#allocation4], 128
    $region49: #{tpu_custom_call.1} parent=1 // pred_fallthru
      _
    %294 = vsyncpa [#allocation3], 1
    %295 = vsyncpa [#allocation6], 1
    %296 = vsyncpa [#allocation9], 1
    %297 = vsyncpa [#allocation4], 1

</llo_original>
